<compile_context>
chip_gen: v5e
topology: v5e:2x2
jax: 0.10.0
libtpu: 0.0.40
codegen_flags: <defaults>
</compile_context>

<pallas_src>
import jax
import jax.numpy as jnp
from jax.experimental import pallas as pl
from jax.experimental.pallas import tpu as pltpu


def _round_up(n: int, m: int) -> int:
    return ((n + m - 1) // m) * m


def _tpu_vmem_capacity_bytes(default: int = 64 * 1024 * 1024) -> int:
    """Best-effort VMEM capacity query; conservative (v7x-sized) fallback."""
    try:
        return int(pltpu.get_tpu_info().vmem_capacity_bytes)
    except Exception:
        return default


def _make_sge_kernel(hw: int):
    """SGE kernel for spatial size hw (= h*w); block last dims are full-extent."""
    inv_hw = 1.0 / float(hw)
    inv_hw_m1 = 1.0 / float(hw - 1)          # torch.std is unbiased (ddof=1)

    def kernel(x_ref, wb_ref, o_ref):
        # x_ref / o_ref: (R, cpg, hw); wb_ref: (R, 1, 2) with lane 0 = weight, lane 1 = bias.
        xg = x_ref[...].astype(jnp.float32)

        # Adaptive avg-pool over the spatial axis, per (row, channel).
        avg = jnp.sum(xg, axis=2, keepdims=True) * inv_hw            # (R, cpg, 1)
        # xn = x * avg_pool(x), summed over the channels of the group.
        t = jnp.sum(xg * avg, axis=1, keepdims=True)                 # (R, 1, hw)

        # Normalize over the spatial positions of each (batch, group) row.
        mean_t = jnp.sum(t, axis=2, keepdims=True) * inv_hw          # (R, 1, 1)
        tc = t - mean_t
        var = jnp.sum(tc * tc, axis=2, keepdims=True) * inv_hw_m1    # (R, 1, 1)
        inv_std = pl.reciprocal(jnp.sqrt(var) + 1e-5, approx=False)  # exact: 1/(std+1e-5)

        # Per-(batch, group) affine (weight/bias packed on the lane axis), then sigmoid.
        wb = wb_ref[...]                                             # (R, 1, 2)
        w_col = wb[:, :, 0:1]                                        # (R, 1, 1)
        b_col = wb[:, :, 1:2]                                        # (R, 1, 1)
        gate = jax.nn.sigmoid(tc * (inv_std * w_col) + b_col)        # (R, 1, hw) f32

        # Apply the gate in the input dtype (big multiply stays bf16 for bf16 inputs).
        o_ref[...] = x_ref[...] * gate.astype(o_ref.dtype)

    return kernel


def spatial_group_enhance(x, weight, bias, groups, *, vmem_limit_bytes=None):
    """x: (b, c, h, w). weight/bias: (1, groups, 1, 1). Matches the PyTorch forward."""
    b, c, h, w = x.shape
    assert c % groups == 0, "channels must be divisible by groups"
    cpg = c // groups
    hw = h * w
    assert hw > 1, "h*w must be > 1 (unbiased std divides by h*w - 1)"
    bg = b * groups

    # Free view: (b, c, h, w) -> (b*groups, cpg, h*w).  No pad, no extra HBM pass.
    xr = x.reshape(bg, cpg, hw)

    # Per-(batch, group) affine params, packed on the lane axis: row r = batch*groups + g.
    w_rows = jnp.tile(weight.reshape(groups), (b,))                  # (bg,)
    b_rows = jnp.tile(bias.reshape(groups), (b,))                    # (bg,)
    wb = jnp.stack([w_rows, b_rows], axis=-1).reshape(bg, 1, 2).astype(jnp.float32)

    # ---- Generation-aware VMEM budget ---------------------------------------
    if vmem_limit_bytes is None:
        vmem_cap = _tpu_vmem_capacity_bytes()
        # v5e/v6e: 128 MiB VMEM per core -> 64 MiB scoped limit; v7x (64 MiB): 40 MiB.
        vmem_limit = (64 if vmem_cap >= 96 * 2**20 else 40) * 2**20
    else:
        vmem_limit = int(vmem_limit_bytes)

    # ---- Block sizing: budget on PADDED VMEM footprint, cdiv grid ------------
    itemsize = x.dtype.itemsize
    cpg_p = _round_up(cpg, 8)
    hw_p = _round_up(hw, 128)
    row_data = cpg_p * hw_p * itemsize         # one row of an in/out block (padded tiles)
    row_f32 = cpg_p * hw_p * 4                 # block-sized f32 temps (xg, xg*avg, product)
    row_vec = 8 * hw_p * 4                     # (R,1,hw) f32 row-vector temps (t, tc, gate, ...)
    row_par = 2 * (8 * 128 * 4)                # packed (1,2) param tile, double-buffered

    # 4 pipelined data buffers + ~3 block-sized f32 temps + ~6 row-vector temps + params.
    per_row = 4 * row_data + 3 * row_f32 + 6 * row_vec + row_par
    budget = int(0.75 * vmem_limit)            # headroom for compiler scratch
    r_rows = max(1, min(bg, budget // per_row))
    if bg >= 2:
        # Keep >= 2 grid steps so both v7x TensorCores get work (harmless on v5e/v6e).
        r_rows = min(r_rows, pl.cdiv(bg, 2))
    grid0 = pl.cdiv(bg, r_rows)                # partial last block is fine (rows never mix)

    nelem = bg * cpg * hw
    cost = pl.CostEstimate(
        flops=int(6 * nelem + 10 * bg * hw),
        transcendentals=int(bg * hw),
        bytes_accessed=int(2 * nelem * itemsize + wb.size * 4),
    )

    out = pl.pallas_call(
        _make_sge_kernel(hw),
        out_shape=jax.ShapeDtypeStruct((bg, cpg, hw), x.dtype),
        grid_spec=pltpu.PrefetchScalarGridSpec(
            num_scalar_prefetch=0,
            grid=(grid0,),
            in_specs=[
                pl.BlockSpec((r_rows, cpg, hw), lambda i: (i, 0, 0)),
                pl.BlockSpec((r_rows, 1, 2), lambda i: (i, 0, 0)),
            ],
            out_specs=pl.BlockSpec((r_rows, cpg, hw), lambda i: (i, 0, 0)),
        ),
        compiler_params=pltpu.CompilerParams(
            dimension_semantics=("parallel",),
            vmem_limit_bytes=vmem_limit,
        ),
        cost_estimate=cost,
    )(xr, wb)

    return out.reshape(b, c, h, w)


def spatial_group_enhance_ref(x, weight, bias, groups):
    """Pure-JAX reference mirroring the PyTorch forward exactly."""
    b, c, h, w = x.shape
    cpg = c // groups
    xg = x.reshape(b * groups, cpg, h, w)
    avg = jnp.mean(xg, axis=(2, 3), keepdims=True)
    xn = jnp.sum(xg * avg, axis=1, keepdims=True)         # (b*g, 1, h, w)
    t = xn.reshape(b * groups, -1)
    t = t - jnp.mean(t, axis=1, keepdims=True)
    std = jnp.std(t, axis=1, keepdims=True, ddof=1) + 1e-5
    t = t / std
    t = t.reshape(b, groups, h, w)
    t = t * weight + bias
    t = t.reshape(b * groups, 1, h, w)
    xg = xg * jax.nn.sigmoid(t)
    return xg.reshape(b, c, h, w)


if __name__ == "__main__":
    key = jax.random.PRNGKey(0)
    kx, kw, kb = jax.random.split(key, 3)

    # Primary shape (h*w = 256): b=2, c=4, spatial=16, groups=2.
    b, c, h, w = 2, 4, 16, 16
    groups = 2
    x = jax.random.normal(kx, (b, c, h, w), dtype=jnp.float32)
    weight = 0.1 * jax.random.normal(kw, (1, groups, 1, 1), dtype=jnp.float32)
    bias = jnp.ones((1, groups, 1, 1), jnp.float32) + \
        0.1 * jax.random.normal(kb, (1, groups, 1, 1), dtype=jnp.float32)

    out = jax.block_until_ready(spatial_group_enhance(x, weight, bias, groups))
    ref = spatial_group_enhance_ref(x, weight, bias, groups)
    assert out.shape == (b, c, h, w)
    assert jnp.allclose(out, ref, atol=1e-5, rtol=1e-5), "mismatch vs reference (hw=256)"

    # h*w = 49 (not a multiple of 128): exercises the unpadded lane path.
    b2, c2, h2, w2, g2 = 2, 8, 7, 7, 4
    kx2, kw2, kb2 = jax.random.split(jax.random.PRNGKey(1), 3)
    x2 = jax.random.normal(kx2, (b2, c2, h2, w2), dtype=jnp.float32)
    w2p = 0.1 * jax.random.normal(kw2, (1, g2, 1, 1), dtype=jnp.float32)
    b2p = jnp.ones((1, g2, 1, 1), jnp.float32) + \
        0.1 * jax.random.normal(kb2, (1, g2, 1, 1), dtype=jnp.float32)
    out2 = jax.block_until_ready(spatial_group_enhance(x2, w2p, b2p, g2))
    ref2 = spatial_group_enhance_ref(x2, w2p, b2p, g2)
    assert jnp.allclose(out2, ref2, atol=1e-5, rtol=1e-5), "mismatch vs reference (hw=49)"

    # bg = 15 with an 8-row block: exercises the partial (cdiv) last block path.
    b3, c3, h3, w3, g3 = 5, 9, 5, 5, 3
    kx3, kw3, kb3 = jax.random.split(jax.random.PRNGKey(2), 3)
    x3 = jax.random.normal(kx3, (b3, c3, h3, w3), dtype=jnp.float32)
    w3p = 0.1 * jax.random.normal(kw3, (1, g3, 1, 1), dtype=jnp.float32)
    b3p = jnp.ones((1, g3, 1, 1), jnp.float32) + \
        0.1 * jax.random.normal(kb3, (1, g3, 1, 1), dtype=jnp.float32)
    out3 = jax.block_until_ready(spatial_group_enhance(x3, w3p, b3p, g3))
    ref3 = spatial_group_enhance_ref(x3, w3p, b3p, g3)
    assert jnp.allclose(out3, ref3, atol=1e-5, rtol=1e-5), "mismatch vs reference (bg=15)"

    print("KERNEL_OK")
</pallas_src>

<mosaic_0001>
module attributes {stable_mosaic.version = 11 : i64} {
  func.func @kernel(%arg0: i32, %arg1: memref<2x2x256xf32, #tpu.memory_space<vmem>>, %arg2: memref<2x1x2xf32, #tpu.memory_space<vmem>>, %arg3: memref<2x2x256xf32, #tpu.memory_space<vmem>>) attributes {dimension_semantics = [#tpu.dimension_semantics<parallel>], iteration_bounds = array<i64: 2>, scalar_prefetch = 0 : i64, scratch_operands = 0 : i64, tpu.core_type = #tpu.core_type<tc>, window_params = [{transform_indices = @transform_0, window_bounds = array<i64: 2, 2, 256>}, {transform_indices = @transform_1, window_bounds = array<i64: 2, 1, 2>}, {transform_indices = @transform_2, window_bounds = array<i64: 2, 2, 256>}]} {
    %c0 = arith.constant 0 : index
    %c0_0 = arith.constant 0 : index
    %c0_1 = arith.constant 0 : index
    %0 = vector.load %arg1[%c0, %c0_0, %c0_1] : memref<2x2x256xf32, #tpu.memory_space<vmem>>, vector<2x2x256xf32>
    %cst = arith.constant dense<0.000000e+00> : vector<2x2xf32>
    %1 = vector.multi_reduction <add>, %0, %cst [2] : vector<2x2x256xf32> to vector<2x2xf32>
    %2 = vector.shape_cast %1 : vector<2x2xf32> to vector<2x2x1xf32>
    %cst_2 = arith.constant 3.906250e-03 : f32
    %3 = vector.broadcast %cst_2 : f32 to vector<2x2x1xf32>
    %4 = arith.mulf %2, %3 : vector<2x2x1xf32>
    %5 = vector.broadcast %4 : vector<2x2x1xf32> to vector<2x2x256xf32>
    %6 = arith.mulf %0, %5 : vector<2x2x256xf32>
    %cst_3 = arith.constant dense<0.000000e+00> : vector<2x256xf32>
    %7 = vector.multi_reduction <add>, %6, %cst_3 [1] : vector<2x2x256xf32> to vector<2x256xf32>
    %8 = vector.shape_cast %7 : vector<2x256xf32> to vector<2x1x256xf32>
    %cst_4 = arith.constant dense<0.000000e+00> : vector<2x1xf32>
    %9 = vector.multi_reduction <add>, %8, %cst_4 [2] : vector<2x1x256xf32> to vector<2x1xf32>
    %10 = vector.shape_cast %9 : vector<2x1xf32> to vector<2x1x1xf32>
    %cst_5 = arith.constant 3.906250e-03 : f32
    %11 = vector.broadcast %cst_5 : f32 to vector<2x1x1xf32>
    %12 = arith.mulf %10, %11 : vector<2x1x1xf32>
    %13 = vector.broadcast %12 : vector<2x1x1xf32> to vector<2x1x256xf32>
    %14 = arith.subf %8, %13 : vector<2x1x256xf32>
    %15 = arith.mulf %14, %14 : vector<2x1x256xf32>
    %cst_6 = arith.constant dense<0.000000e+00> : vector<2x1xf32>
    %16 = vector.multi_reduction <add>, %15, %cst_6 [2] : vector<2x1x256xf32> to vector<2x1xf32>
    %17 = vector.shape_cast %16 : vector<2x1xf32> to vector<2x1x1xf32>
    %cst_7 = arith.constant 0.00392156886 : f32
    %18 = vector.broadcast %cst_7 : f32 to vector<2x1x1xf32>
    %19 = arith.mulf %17, %18 : vector<2x1x1xf32>
    %20 = math.sqrt %19 : vector<2x1x1xf32>
    %cst_8 = arith.constant 9.99999974E-6 : f32
    %21 = vector.broadcast %cst_8 : f32 to vector<2x1x1xf32>
    %22 = arith.addf %20, %21 : vector<2x1x1xf32>
    %23 = tpu.reciprocal %22 : vector<2x1x1xf32> -> vector<2x1x1xf32>
    %c0_9 = arith.constant 0 : index
    %c0_10 = arith.constant 0 : index
    %c0_11 = arith.constant 0 : index
    %24 = vector.load %arg2[%c0_9, %c0_10, %c0_11] : memref<2x1x2xf32, #tpu.memory_space<vmem>>, vector<2x1x2xf32>
    %25 = vector.extract_strided_slice %24 {offsets = [0, 0, 0], sizes = [2, 1, 1], strides = [1, 1, 1]} : vector<2x1x2xf32> to vector<2x1x1xf32>
    %26 = vector.extract_strided_slice %24 {offsets = [0, 0, 1], sizes = [2, 1, 1], strides = [1, 1, 1]} : vector<2x1x2xf32> to vector<2x1x1xf32>
    %27 = arith.mulf %23, %25 : vector<2x1x1xf32>
    %28 = vector.broadcast %27 : vector<2x1x1xf32> to vector<2x1x256xf32>
    %29 = arith.mulf %14, %28 : vector<2x1x256xf32>
    %30 = vector.broadcast %26 : vector<2x1x1xf32> to vector<2x1x256xf32>
    %31 = arith.addf %29, %30 : vector<2x1x256xf32>
    %32 = arith.negf %31 : vector<2x1x256xf32>
    %33 = math.exp %32 : vector<2x1x256xf32>
    %cst_12 = arith.constant 1.000000e+00 : f32
    %34 = vector.broadcast %cst_12 : f32 to vector<2x1x256xf32>
    %35 = arith.addf %34, %33 : vector<2x1x256xf32>
    %36 = arith.divf %34, %35 : vector<2x1x256xf32>
    %c0_13 = arith.constant 0 : index
    %c0_14 = arith.constant 0 : index
    %c0_15 = arith.constant 0 : index
    %37 = vector.load %arg1[%c0_13, %c0_14, %c0_15] : memref<2x2x256xf32, #tpu.memory_space<vmem>>, vector<2x2x256xf32>
    %38 = vector.broadcast %36 : vector<2x1x256xf32> to vector<2x2x256xf32>
    %39 = arith.mulf %37, %38 : vector<2x2x256xf32>
    %c0_16 = arith.constant 0 : index
    %c0_17 = arith.constant 0 : index
    %c0_18 = arith.constant 0 : index
    %40 = vector.load %arg3[%c0_16, %c0_17, %c0_18] : memref<2x2x256xf32, #tpu.memory_space<vmem>>, vector<2x2x256xf32>
    tpu.vector_store %arg3[%c0_16, %c0_17, %c0_18], %39 {strides = array<i32>} : memref<2x2x256xf32, #tpu.memory_space<vmem>>, vector<2x2x256xf32>,
    return
  }
  func.func @transform_0(%arg0: i32) -> (i32, i32, i32) {
    %c0_i32 = arith.constant 0 : i32
    %c0_i32_0 = arith.constant 0 : i32
    %c0_i32_1 = arith.constant 0 : i32
    return %arg0, %c0_i32, %c0_i32_0 : i32, i32, i32
  }
  func.func @transform_1(%arg0: i32) -> (i32, i32, i32) {
    %c0_i32 = arith.constant 0 : i32
    %c0_i32_0 = arith.constant 0 : i32
    %c0_i32_1 = arith.constant 0 : i32
    return %arg0, %c0_i32, %c0_i32_0 : i32, i32, i32
  }
  func.func @transform_2(%arg0: i32) -> (i32, i32, i32) {
    %c0_i32 = arith.constant 0 : i32
    %c0_i32_0 = arith.constant 0 : i32
    %c0_i32_1 = arith.constant 0 : i32
    return %arg0, %c0_i32, %c0_i32_0 : i32, i32, i32
  }
}

</mosaic_0001>

<llo_original>
// kernel: tpu_custom_call.1
$region0: #{tpu_custom_call.1}
  #allocation0 [shape = 'u32[]', space=smem, size = 0x4, offset = 0x4, fixed_abs, tag = 'smem constant byte address 0x4 - core index']
  #allocation1 [shape = 'u32[72,128]{1,0:T(1,128)}', space=vmem, size = 0x9000, scoped, tag = 'internal scratch']
  %s0 = inlined_call_operand.hbm [shape: f32[4,2,256], index: 0, kind: input, shape index: {}]
  %s1 = inlined_call_operand.vmem [shape: f32[4,1,2], index: 1, kind: input, shape index: {}]
  %s2 = inlined_call_operand.hbm [shape: f32[4,2,256], index: 2, kind: output, shape index: {}]
  %s3 = sld [smem:[#allocation0]]
  $region45: #{tpu_custom_call.1} parent=0
    _
  %s5 = ssub.s32 1, %s3
  %s6 = scalar_select 0, %s5, %s3
  $region1: #{tpu_custom_call.1} parent=0
    #allocation2 [shape = 'u8[8192]{0}', space=vmem, size = 0x2000, scoped, tag = 'input window, operand 0']
    #allocation3 [shape = 's32[2]{0}', space=sflag, size = 0x8, scoped, tag = 'scoped memory for tpu_custom_call.1']
    #allocation4 [shape = 's32[2]{0}', space=sflag, size = 0x8, scoped, tag = 'scoped memory for tpu_custom_call.1']
    #allocation5 [shape = 'u8[8192]{0}', space=vmem, size = 0x2000, scoped, tag = 'output window, operand 0']
    %7 = vsyncpa [#allocation3], 0
    %s8 = scalar_lea.sflag [#allocation3], 1
    %9 = vsyncpa %s8, 0
    %10 = vsyncpa [#allocation4], 0
    %s11 = scalar_lea.sflag [#allocation4], 1
    %12 = vsyncpa %s11, 0
    loop: start=0, step=1, limit=4
    $region2: #{tpu_custom_call.1} parent=1 // loop_pre_header
      _
    $region3: #{tpu_custom_call.1} parent=1 // loop_header
      %s14 = sphi 0, %s18
      %p15 = scmp.ge.s32.totalorder %s14, 4
      %s24 = sphi 0, %s26
      %s27 = sphi 0, %s24
      %s28 = sphi 0, %s27
      %s44 = sphi 0, %s28
      %s50 = sphi 0, %s52
      %s53 = sphi 0, %s50
      %s54 = sphi 0, %s53
      %s70 = sphi 0, %s54
      %s76 = sphi 0, %s78
      %s79 = sphi 0, %s76
      %s80 = sphi 0, %s79
      %s96 = sphi 0, %s80
    $region4: #{tpu_custom_call.1} parent=1 // loop_header_branch
      %17 = sbr.rel (%p15) target = $region8
    $region5: #{tpu_custom_call.1} parent=1 // loop_body
      %s19 = ssub.s32 %s14, 1
      %s20 = ssub.s32 %s14, 2
      %s21 = sadd.s32 %s14, 1
      %s22 = ssub.s32 %s14, %s21
      %p23 = scmp.eq.s32.totalorder %s22, 0
      %s25 = sadd.s32 %s24, 1
      %s26 = scalar_select %p23, %s24, %s25
      %p29 = pneg %p23
      %p30 = scmp.eq.s32.totalorder %s14, 1
      %p31 = por %p29, %p30
      %p32 = scmp.ne.s32.totalorder %s24, %s27
      %p33 = scmp.eq.s32.totalorder %s14, 0
      %p34 = por %p32, %p33
      %p35 = scmp.ne.s32.totalorder %s24, %s27
      %p36 = scmp.eq.s32.totalorder %s19, 1
      %p37 = por %p35, %p36
      %p38 = scmp.ne.s32.totalorder %s27, %s28
      %p39 = scmp.eq.s32.totalorder %s19, 0
      %p40 = por %p38, %p39
      %p41 = scmp.ne.s32.totalorder %s27, %s28
      %p42 = scmp.eq.s32.totalorder %s20, 1
      %p43 = por %p41, %p42
      %p45 = scmp.ne.s32.totalorder %s28, %s44
      %p46 = scmp.eq.s32.totalorder %s20, 0
      %p47 = por %p45, %p46
      %s48 = ssub.s32 %s14, %s21
      %p49 = scmp.eq.s32.totalorder %s48, 0
      %s51 = sadd.s32 %s50, 1
      %s52 = scalar_select %p49, %s50, %s51
      %p55 = pneg %p49
      %p56 = scmp.eq.s32.totalorder %s14, 1
      %p57 = por %p55, %p56
      %p58 = scmp.ne.s32.totalorder %s50, %s53
      %p59 = scmp.eq.s32.totalorder %s14, 0
      %p60 = por %p58, %p59
      %p61 = scmp.ne.s32.totalorder %s50, %s53
      %p62 = scmp.eq.s32.totalorder %s19, 1
      %p63 = por %p61, %p62
      %p64 = scmp.ne.s32.totalorder %s53, %s54
      %p65 = scmp.eq.s32.totalorder %s19, 0
      %p66 = por %p64, %p65
      %p67 = scmp.ne.s32.totalorder %s53, %s54
      %p68 = scmp.eq.s32.totalorder %s20, 1
      %p69 = por %p67, %p68
      %p71 = scmp.ne.s32.totalorder %s54, %s70
      %p72 = scmp.eq.s32.totalorder %s20, 0
      %p73 = por %p71, %p72
      %s74 = ssub.s32 %s14, %s21
      %p75 = scmp.eq.s32.totalorder %s74, 0
      %s77 = sadd.s32 %s76, 1
      %s78 = scalar_select %p75, %s76, %s77
      %p81 = pneg %p75
      %p82 = scmp.eq.s32.totalorder %s14, 1
      %p83 = por %p81, %p82
      %p84 = scmp.ne.s32.totalorder %s76, %s79
      %p85 = scmp.eq.s32.totalorder %s14, 0
      %p86 = por %p84, %p85
      %p87 = scmp.ne.s32.totalorder %s76, %s79
      %p88 = scmp.eq.s32.totalorder %s19, 1
      %p89 = por %p87, %p88
      %p90 = scmp.ne.s32.totalorder %s79, %s80
      %p91 = scmp.eq.s32.totalorder %s19, 0
      %p92 = por %p90, %p91
      %p93 = scmp.ne.s32.totalorder %s79, %s80
      %p94 = scmp.eq.s32.totalorder %s20, 1
      %p95 = por %p93, %p94
      %p97 = scmp.ne.s32.totalorder %s80, %s96
      %p98 = scmp.eq.s32.totalorder %s20, 0
      %p99 = por %p97, %p98
      %p100 = scmp.le.s32.totalorder 1, %s14
      %p101 = scmp.lt.s32.totalorder %s14, 3
      %p102 = pnand %p100, %p101
      %p103 = pneg %p102
      // Predicated region
      $region9: #{tpu_custom_call.1} parent=5 // pred_check
        _
      $region10: #{tpu_custom_call.1} parent=5 // pred_check_branch
        %105 = sbr.rel (%p102) target = $region12
      $region11: #{tpu_custom_call.1} parent=5 // pred_region
        %s106 = ssub.s32 %s14, 1
      $region12: #{tpu_custom_call.1} parent=5 // pred_fallthru
        _
      %p107 = scmp.lt.s32.totalorder %s14, 2
      // Predicated region
      $region13: #{tpu_custom_call.1} parent=5 // pred_check
        %p108 = pneg %p107
      $region14: #{tpu_custom_call.1} parent=5 // pred_check_branch
        %110 = sbr.rel (%p108) target = $region16
      $region15: #{tpu_custom_call.1} parent=5 // pred_region
        // Predicated region
        $region17: #{tpu_custom_call.1} parent=15 // pred_check
          %p111 = pneg %p34
        $region18: #{tpu_custom_call.1} parent=15 // pred_check_branch
          %113 = sbr.rel (%p111) target = $region20
        $region19: #{tpu_custom_call.1} parent=15 // pred_region
          %s114 = sand.u32 %s24, 1
          %s115 = scalar_lea.sflag [#allocation3], %s114
          %s116 = sand.u32 %s24, 1
          %s117 = smul.addr %s116, 8
          %s118 = scalar_lea.vmem [#allocation2], %s117
          %s119 = smul.u32 2, %s14
          %121 = vsyncadd %s115, 0
          %s122 = smul.addr %s119, 2
          %s123 = smul.addr %s122, 2
          %s124 = scalar_lea.hbm %s0, %s123
          %s125 = sshll.u32 %s124, 4
          %s126 = int_to_ptr.hbm [resolvable:$true] %s125
          %s127 = sshll.u32 %s118, 4
          %s128 = int_to_ptr.vmem [resolvable:$true] %s127
          %133 = dma.hbm_to_vmem [thread:$0]  %s126, 128, %s128, %s115, 64, 64, 4
        $region20: #{tpu_custom_call.1} parent=15 // pred_fallthru
          _
        // Predicated region
        $region21: #{tpu_custom_call.1} parent=15 // pred_check
          %p134 = pneg %p60
        $region22: #{tpu_custom_call.1} parent=15 // pred_check_branch
          %136 = sbr.rel (%p134) target = $region24
        $region23: #{tpu_custom_call.1} parent=15 // pred_region
          %s137 = smul.u32 2, %s14
          %p138 = scmp.lt.s32.totalorder %s137, 3
          %s139 = scalar_select %p138, %s137, 3
          %s140 = scalar_lea.vmem %s1, %s139
          %s141 = smul.u32 2, %s14
        $region24: #{tpu_custom_call.1} parent=15 // pred_fallthru
          _
      $region16: #{tpu_custom_call.1} parent=5 // pred_fallthru
        _
      %p142 = scmp.le.s32.totalorder 1, %s14
      %p143 = scmp.lt.s32.totalorder %s14, 3
      %p144 = pnand %p142, %p143
      %p145 = pneg %p144
      // Predicated region
      $region25: #{tpu_custom_call.1} parent=5 // pred_check
        _
      $region26: #{tpu_custom_call.1} parent=5 // pred_check_branch
        %147 = sbr.rel (%p144) target = $region28
      $region27: #{tpu_custom_call.1} parent=5 // pred_region
        %s148 = ssub.s32 %s14, 1
        %s149 = sand.u32 %s27, 1
        %s150 = scalar_lea.sflag [#allocation3], %s149
        %s151 = sand.u32 %s27, 1
        %s152 = smul.addr %s151, 8
        %s153 = scalar_lea.vmem [#allocation2], %s152
        // Predicated region
        $region29: #{tpu_custom_call.1} parent=27 // pred_check
          %p154 = pneg %p40
        $region30: #{tpu_custom_call.1} parent=27 // pred_check_branch
          %156 = sbr.rel (%p154) target = $region32
        $region31: #{tpu_custom_call.1} parent=27 // pred_region
          %158 = dma.done %s150, 128
        $region32: #{tpu_custom_call.1} parent=27 // pred_fallthru
          _
        %s159 = sand.u32 %s27, 1
        %s160 = scalar_lea.sflag [#allocation3], %s159
        %s161 = sand.u32 %s27, 1
        %s162 = smul.addr %s161, 8
        %s163 = scalar_lea.vmem [#allocation2], %s162
        %p164 = pneg %p40
        %p165 = pneg %p37
        %s166 = smul.u32 2, %s19
        %p167 = scmp.lt.s32.totalorder %s166, 3
        %s168 = scalar_select %p167, %s166, 3
        %s169 = scalar_lea.vmem %s1, %s168
        %p170 = pneg %p66
        %p171 = pneg %p63
        %p172 = pneg %p92
        %p173 = pneg %p89
        %s174 = sand.u32 %s79, 1
        %s175 = scalar_lea.sflag [#allocation4], %s174
        %s176 = sand.u32 %s79, 1
        %s177 = smul.addr %s176, 8
        %s178 = scalar_lea.vmem [#allocation5], %s177
        %s179 = smul.u32 2, %s19
        %s180 = smul.u32 2, %s19
        %p181 = scmp.lt.s32.totalorder %s180, 3
        %s182 = scalar_select %p181, %s180, 3
        %s183 = scalar_lea.vmem %s1, %s182
        %s184 = smul.u32 2, %s19
        %s185 = smul.u32 2, %s19
        %v186 = vld [vmem:[%s153] sm:$0xf]
        %v187 = vld [vmem:[%s153 + $0x4] sm:$0xf]
        %190 = vst [vmem:[#allocation1] ss:$4 sm:$0xff] %v186
        %v191 = vld.sshfl [vmem:[#allocation1] sm:$0xff pattern:$0x73625140]
        %v192 = vld.sshfl [vmem:[#allocation1 + $0x8] sm:$0xff pattern:$0x73625140]
        %s193 = scalar_lea.vmem [#allocation1], 32
        %194 = vst [vmem:[%s193] ss:$4 sm:$0xff] %v187
        %v195 = vld.sshfl [vmem:[#allocation1 + $0x20] sm:$0xff pattern:$0x73625140]
        %v196 = vld.sshfl [vmem:[#allocation1 + $0x28] sm:$0xff pattern:$0x73625140]
        %vm201 = vcmask 1041408
        %v202 = vsel %vm201, %v191, 0.0
        %v203 = vsel %vm201, %v192, 0.0
        %v204 = vadd.f32 %v202, %v203
        %205 = vadd.xlane.f32.xlu0 %v204
        %v206 = vpop.xlane.xlu0 %205
        %v207 = vsel %vm201, %v195, 0.0
        %v208 = vsel %vm201, %v196, 0.0
        %v209 = vadd.f32 %v207, %v208
        %210 = vadd.xlane.f32.xlu0 %v209
        %v211 = vpop.xlane.xlu0 %210
        %v212 = vmul.f32 %v206, 0.00390625
        %v213 = vmul.f32 %v211, 0.00390625
        %v217 = vunpack.c.l.s4 269488144
        %v218 = vunpack.c.0.s8 %v217
        %v219 = vperm.slane %v212, %v218
        %v221 = vunpack.c.l.s4 269488144
        %v222 = vunpack.c.0.s8 %v221
        %v223 = vperm.slane %v213, %v222
        %v226 = vmul.f32 %v186, %v219
        %v227 = vmul.f32 %v187, %v223
        %230 = vst [vmem:[#allocation1] ss:$4 sm:$0xff] %v226
        %v231 = vld.sshfl [vmem:[#allocation1] sm:$0xff pattern:$0x73625140]
        %v232 = vld.sshfl [vmem:[#allocation1 + $0x8] sm:$0xff pattern:$0x73625140]
        %s233 = scalar_lea.vmem [#allocation1], 32
        %234 = vst [vmem:[%s233] ss:$4 sm:$0xff] %v227
        %v235 = vld.sshfl [vmem:[#allocation1 + $0x20] sm:$0xff pattern:$0x73625140]
        %v236 = vld.sshfl [vmem:[#allocation1 + $0x28] sm:$0xff pattern:$0x73625140]
        %v241 = vsel %vm201, %v231, 0.0
        %v242 = vrot.slane %v241, 4
        %v243 = vadd.f32 %v241, %v242
        %v244 = vrot.slane %v243, 2
        %v245 = vadd.f32 %v243, %v244
        %v246 = vrot.slane %v245, 1
        %v247 = vadd.f32 %v245, %v246
        %v248 = vsel %vm201, %v232, 0.0
        %v249 = vrot.slane %v248, 4
        %v250 = vadd.f32 %v248, %v249
        %v251 = vrot.slane %v250, 2
        %v252 = vadd.f32 %v250, %v251
        %v253 = vrot.slane %v252, 1
        %v254 = vadd.f32 %v252, %v253
        %v255 = vsel %vm201, %v235, 0.0
        %v256 = vrot.slane %v255, 4
        %v257 = vadd.f32 %v255, %v256
        %v258 = vrot.slane %v257, 2
        %v259 = vadd.f32 %v257, %v258
        %v260 = vrot.slane %v259, 1
        %v261 = vadd.f32 %v259, %v260
        %v262 = vsel %vm201, %v236, 0.0
        %v263 = vrot.slane %v262, 4
        %v264 = vadd.f32 %v262, %v263
        %v265 = vrot.slane %v264, 2
        %v266 = vadd.f32 %v264, %v265
        %v267 = vrot.slane %v266, 1
        %v268 = vadd.f32 %v266, %v267
        %v269 = vadd.f32 %v247, %v254
        %270 = vadd.xlane.f32.xlu0 %v269
        %v271 = vpop.xlane.xlu0 %270
        %v272 = vadd.f32 %v261, %v268
        %273 = vadd.xlane.f32.xlu0 %v272
        %v274 = vpop.xlane.xlu0 %273
        %v275 = vmul.f32 %v271, 0.00390625
        %v276 = vmul.f32 %v274, 0.00390625
        %v277 = vsub.f32 %v247, %v275
        %v278 = vsub.f32 %v254, %v275
        %v279 = vsub.f32 %v261, %v276
        %v280 = vsub.f32 %v268, %v276
        %v281 = vmul.f32 %v277, %v277
        %v282 = vmul.f32 %v278, %v278
        %v283 = vmul.f32 %v279, %v279
        %v284 = vmul.f32 %v280, %v280
        %v285 = vadd.f32 %v281, %v282
        %286 = vadd.xlane.f32.xlu0 %v285
        %v287 = vpop.xlane.xlu0 %286
        %v288 = vadd.f32 %v283, %v284
        %289 = vadd.xlane.f32.xlu0 %v288
        %v290 = vpop.xlane.xlu0 %289
        %v291 = vmul.f32 %v287, 0.003921569
        %v292 = vmul.f32 %v290, 0.003921569
        %v293 = vrsqrt.pop %v291
        %v294 = vmul.f32 %v293, %v291
        %v295 = vmul.f32 %v294, %v293
        %v296 = vmul.f32 0.5, %v295
        %v297 = vsub.f32 1.5, %v296
        %v298 = vmul.f32 %v293, %v297
        %v299 = vmul.f32 %v291, %v298
        %vm300 = vcmp.eq.f32.partialorder %v291, inf
        %v301 = vsel %vm300, %v291, %v299
        %vm302 = vcmp.eq.f32.partialorder %v291, 0.0
        %v303 = vand.u32 %v291, 2147483648
        %v304 = vsel %vm302, %v303, %v301
        %v305 = vrsqrt.pop %v292
        %v306 = vmul.f32 %v305, %v292
        %v307 = vmul.f32 %v306, %v305
        %v308 = vmul.f32 0.5, %v307
        %v309 = vsub.f32 1.5, %v308
        %v310 = vmul.f32 %v305, %v309
        %v311 = vmul.f32 %v292, %v310
        %vm312 = vcmp.eq.f32.partialorder %v292, inf
        %v313 = vsel %vm312, %v292, %v311
        %vm314 = vcmp.eq.f32.partialorder %v292, 0.0
        %v315 = vand.u32 %v292, 2147483648
        %v316 = vsel %vm314, %v315, %v313
        %v317 = vadd.f32 %v304, 1e-05
        %v318 = vadd.f32 %v316, 1e-05
        %v319 = vrcp.pop %v317
        %v320 = vmul.f32 %v317, %v319
        %v321 = vsub.f32 1.0, %v320
        %v322 = vmul.f32 %v319, %v321
        %v323 = vadd.f32 %v319, %v322
        %vm324 = vweird.f32 %v317
        %vm325 = vweird.f32 %v319
        %vm326 = vmor %vm324, %vm325
        %v327 = vsel %vm326, %v319, %v323
        %v328 = vand.u32 2147483647, %v317
        %vm329 = vcmp.eq.f32.partialorder %v328, 8.507059e+37
        %v330 = vand.u32 %v317, 2147483648
        %v331 = vor.u32 1.1754944e-38, %v330
        %v332 = vsel %vm329, %v331, %v327
        %v333 = vrcp.pop %v318
        %v334 = vmul.f32 %v318, %v333
        %v335 = vsub.f32 1.0, %v334
        %v336 = vmul.f32 %v333, %v335
        %v337 = vadd.f32 %v333, %v336
        %vm338 = vweird.f32 %v318
        %vm339 = vweird.f32 %v333
        %vm340 = vmor %vm338, %vm339
        %v341 = vsel %vm340, %v333, %v337
        %v342 = vand.u32 2147483647, %v318
        %vm343 = vcmp.eq.f32.partialorder %v342, 8.507059e+37
        %v344 = vand.u32 %v318, 2147483648
        %v345 = vor.u32 1.1754944e-38, %v344
        %v346 = vsel %vm343, %v345, %v341
        %v347 = vld [vmem:[%s183] sm:$0x1]
        %v348 = vld [vmem:[%s183 + $0x1] sm:$0x1]
        %v349 = vmul.f32 %v332, %v347
        %v350 = vmul.f32 %v346, %v348
        %352 = vset.pattern.permute.xlu0 0
        %353 = vperm.xlu0 %352, %v349
        %v354 = vpop.permute.xlu0 %353
        %v356 = vperm.slane %v354, 0
        %358 = vset.pattern.permute.xlu0 0
        %359 = vperm.xlu0 %358, %v350
        %v360 = vpop.permute.xlu0 %359
        %v362 = vperm.slane %v360, 0
        %v363 = vmul.f32 %v277, %v356
        %v364 = vmul.f32 %v278, %v356
        %v365 = vmul.f32 %v279, %v362
        %v366 = vmul.f32 %v280, %v362
        %368 = vset.pattern.permute.xlu0 1
        %369 = vperm.xlu0 %368, %v347
        %v370 = vpop.permute.xlu0 %369
        %v372 = vperm.slane %v370, 0
        %374 = vset.pattern.permute.xlu0 1
        %375 = vperm.xlu0 %374, %v348
        %v376 = vpop.permute.xlu0 %375
        %v378 = vperm.slane %v376, 0
        %v379 = vadd.f32 %v363, %v372
        %v380 = vadd.f32 %v364, %v372
        %v381 = vadd.f32 %v365, %v378
        %v382 = vadd.f32 %v366, %v378
        %v383 = vxor.u32 %v379, 2147483648
        %v384 = vxor.u32 %v380, 2147483648
        %v385 = vxor.u32 %v381, 2147483648
        %v386 = vxor.u32 %v382, 2147483648
        %v387 = vmul.f32 %v383, 1.442695
        %v388 = vpow.pop %v387
        %v389 = vmul.f32 %v384, 1.442695
        %v390 = vpow.pop %v389
        %v391 = vmul.f32 %v385, 1.442695
        %v392 = vpow.pop %v391
        %v393 = vmul.f32 %v386, 1.442695
        %v394 = vpow.pop %v393
        %v395 = vadd.f32 %v388, 1.0
        %v396 = vadd.f32 %v390, 1.0
        %v397 = vadd.f32 %v392, 1.0
        %v398 = vadd.f32 %v394, 1.0
        %v399 = vrcp.pop %v395
        %v400 = vmul.f32 %v395, %v399
        %v401 = vsub.f32 1.0, %v400
        %v402 = vmul.f32 %v399, %v401
        %v403 = vadd.f32 %v399, %v402
        %vm404 = vweird.f32 %v395
        %vm405 = vweird.f32 %v399
        %vm406 = vmor %vm404, %vm405
        %v407 = vsel %vm406, %v399, %v403
        %v408 = vand.u32 2147483647, %v395
        %vm409 = vcmp.eq.f32.partialorder %v408, 8.507059e+37
        %v410 = vand.u32 %v395, 2147483648
        %v411 = vor.u32 1.1754944e-38, %v410
        %v412 = vsel %vm409, %v411, %v407
        %v413 = vmul.f32 1.0, %v412
        %v414 = vrcp.pop %v396
        %v415 = vmul.f32 %v396, %v414
        %v416 = vsub.f32 1.0, %v415
        %v417 = vmul.f32 %v414, %v416
        %v418 = vadd.f32 %v414, %v417
        %vm419 = vweird.f32 %v396
        %vm420 = vweird.f32 %v414
        %vm421 = vmor %vm419, %vm420
        %v422 = vsel %vm421, %v414, %v418
        %v423 = vand.u32 2147483647, %v396
        %vm424 = vcmp.eq.f32.partialorder %v423, 8.507059e+37
        %v425 = vand.u32 %v396, 2147483648
        %v426 = vor.u32 1.1754944e-38, %v425
        %v427 = vsel %vm424, %v426, %v422
        %v428 = vmul.f32 1.0, %v427
        %v429 = vrcp.pop %v397
        %v430 = vmul.f32 %v397, %v429
        %v431 = vsub.f32 1.0, %v430
        %v432 = vmul.f32 %v429, %v431
        %v433 = vadd.f32 %v429, %v432
        %vm434 = vweird.f32 %v397
        %vm435 = vweird.f32 %v429
        %vm436 = vmor %vm434, %vm435
        %v437 = vsel %vm436, %v429, %v433
        %v438 = vand.u32 2147483647, %v397
        %vm439 = vcmp.eq.f32.partialorder %v438, 8.507059e+37
        %v440 = vand.u32 %v397, 2147483648
        %v441 = vor.u32 1.1754944e-38, %v440
        %v442 = vsel %vm439, %v441, %v437
        %v443 = vmul.f32 1.0, %v442
        %v444 = vrcp.pop %v398
        %v445 = vmul.f32 %v398, %v444
        %v446 = vsub.f32 1.0, %v445
        %v447 = vmul.f32 %v444, %v446
        %v448 = vadd.f32 %v444, %v447
        %vm449 = vweird.f32 %v398
        %vm450 = vweird.f32 %v444
        %vm451 = vmor %vm449, %vm450
        %v452 = vsel %vm451, %v444, %v448
        %v453 = vand.u32 2147483647, %v398
        %vm454 = vcmp.eq.f32.partialorder %v453, 8.507059e+37
        %v455 = vand.u32 %v398, 2147483648
        %v456 = vor.u32 1.1754944e-38, %v455
        %v457 = vsel %vm454, %v456, %v452
        %v458 = vmul.f32 1.0, %v457
        %v463 = vrot.slane %v428, 6
        %v464 = vrot.slane %v458, 6
        %v465 = vsel %vm201, %v413, %v463
        %v466 = vsel %vm201, %v443, %v464
        %v469 = vmul.f32 %v186, %v465
        %v470 = vmul.f32 %v187, %v466
        %471 = vst [vmem:[%s178] sm:$0xf] %v469
        %472 = vst [vmem:[%s178 + $0x4] sm:$0xf] %v470
        %s473 = sand.u32 %s79, 1
        %s474 = scalar_lea.sflag [#allocation4], %s473
        %s475 = sand.u32 %s79, 1
        %s476 = smul.addr %s475, 8
        %s477 = scalar_lea.vmem [#allocation5], %s476
        // Predicated region
        $region33: #{tpu_custom_call.1} parent=27 // pred_check
          %p478 = pneg %p89
        $region34: #{tpu_custom_call.1} parent=27 // pred_check_branch
          %480 = sbr.rel (%p478) target = $region36
        $region35: #{tpu_custom_call.1} parent=27 // pred_region
          %s481 = smul.u32 2, %s19
          %483 = vsyncadd %s474, 0
          %s484 = smul.addr %s481, 2
          %s485 = smul.addr %s484, 2
          %s486 = scalar_lea.hbm %s2, %s485
          %s487 = sshll.u32 %s477, 4
          %s488 = int_to_ptr.vmem [resolvable:$true] %s487
          %s489 = sshll.u32 %s486, 4
          %s490 = int_to_ptr.hbm [resolvable:$true] %s489
          %495 = dma.vmem_to_hbm [thread:$0]  %s488, 128, %s490, %s474, 64, 64, 4
        $region36: #{tpu_custom_call.1} parent=27 // pred_fallthru
          _
      $region28: #{tpu_custom_call.1} parent=5 // pred_fallthru
        _
      %p496 = scmp.le.s32.totalorder 2, %s14
      // Predicated region
      $region37: #{tpu_custom_call.1} parent=5 // pred_check
        %p497 = pneg %p496
      $region38: #{tpu_custom_call.1} parent=5 // pred_check_branch
        %499 = sbr.rel (%p497) target = $region40
      $region39: #{tpu_custom_call.1} parent=5 // pred_region
        %s500 = ssub.s32 %s14, 2
        // Predicated region
        $region41: #{tpu_custom_call.1} parent=39 // pred_check
          %p501 = pneg %p95
        $region42: #{tpu_custom_call.1} parent=39 // pred_check_branch
          %503 = sbr.rel (%p501) target = $region44
        $region43: #{tpu_custom_call.1} parent=39 // pred_region
          %s504 = sand.u32 %s80, 1
          %s505 = scalar_lea.sflag [#allocation4], %s504
          %s506 = sand.u32 %s80, 1
          %s507 = smul.addr %s506, 8
          %s508 = scalar_lea.vmem [#allocation5], %s507
          %510 = dma.done %s505, 128
        $region44: #{tpu_custom_call.1} parent=39 // pred_fallthru
          _
      $region40: #{tpu_custom_call.1} parent=5 // pred_fallthru
        _
    $region6: #{tpu_custom_call.1} parent=1 // loop_footer
      %s18 = sadd.s32 1, %s14
    $region7: #{tpu_custom_call.1} parent=1 // loop_footer_branch
      %13 = sbr.rel target = $region3
    $region8: #{tpu_custom_call.1} parent=1 // loop_exit
      _
    %511 = vsyncpa [#allocation3], 1
    %s512 = scalar_lea.sflag [#allocation3], 1
    %513 = vsyncpa %s512, 1
    %514 = vsyncpa [#allocation4], 1
    %s515 = scalar_lea.sflag [#allocation4], 1
    %516 = vsyncpa %s515, 1

</llo_original>
